<compile_context>
chip_gen: v7x
topology: tpu7x:2x2x1
jax: 0.10.0
libtpu: 0.0.40
codegen_flags: <defaults>
</compile_context>

<pallas_src>
import functools

import jax
import jax.numpy as jnp
from jax import lax
from jax.experimental import pallas as pl
from jax.experimental.pallas import tpu as pltpu


_INV_SQRT2 = 0.7071067811865476


def _round_up(n: int, m: int) -> int:
    return ((n + m - 1) // m) * m


@functools.lru_cache(maxsize=1)
def _vmem_capacity_bytes() -> int:
    """Generation-aware per-core VMEM capacity (v5e/v6e: 128 MiB, v7x: 64 MiB/TC)."""
    try:
        cap = int(getattr(pltpu.get_tpu_info(), "vmem_capacity_bytes"))
        if cap > 0:
            return cap
    except Exception:
        pass
    return 64 << 20  # conservative fallback (v7x per-TC size)


def _mlp_kernel(x_ref, w1t_ref, b1_ref, w2t_ref, b2_ref, o_ref, acc_ref, *, compute_dtype):
    # grid = (row tiles, H chunks); the H (reduction) axis is last.
    # x_ref:   (tm, E_pad)    row tile (constant across k)
    # w1t_ref: (E_pad, tk)    c_fc weight chunk, pre-transposed in the wrapper
    # b1_ref:  (1, tk)        fp32
    # w2t_ref: (tk, E_pad)    c_proj weight chunk, pre-transposed in the wrapper
    # b2_ref:  (1, E_pad)     fp32, resident
    # acc_ref: (tm, E_pad)    fp32 accumulator scratch
    k = pl.program_id(1)

    @pl.when(k == 0)
    def _init():
        acc_ref[...] = jnp.zeros_like(acc_ref)

    # c_fc chunk: fp32 accumulation on the MXU.
    h = jnp.dot(x_ref[...], w1t_ref[...], preferred_element_type=jnp.float32)
    h = h + b1_ref[...]
    # exact erf GELU (nn.GELU() default 'none'); GELU(0)==0 so zero-padded cols stay 0.
    h = 0.5 * h * (1.0 + lax.erf(h * jnp.float32(_INV_SQRT2)))
    # c_proj chunk, accumulated over H chunks.
    acc_ref[...] += jnp.dot(h.astype(compute_dtype), w2t_ref[...],
                            preferred_element_type=jnp.float32)

    @pl.when(k == pl.num_programs(1) - 1)
    def _finalize():
        o_ref[...] = (acc_ref[...] + b2_ref[...]).astype(o_ref.dtype)


@functools.partial(jax.jit, static_argnames=("use_bf16", "tile_m", "vmem_cap"))
def _mlp_pallas_impl(x, w1, b1, w2, b2, *, use_bf16, tile_m, vmem_cap):
    B, T, E = x.shape
    H = w1.shape[0]
    M = B * T
    out_dtype = x.dtype
    compute_dtype = jnp.bfloat16 if use_bf16 else jnp.float32
    c_item = 2 if use_bf16 else 4

    # ---- row tiling: low padding waste, >=2 grid steps so v7x uses both TCs ----
    if tile_m is None:
        tile_m = 512 if vmem_cap >= (96 << 20) else 256
    g_m = 1 if M <= 8 else max(2, int(pl.cdiv(M, tile_m)))
    tm = _round_up(int(pl.cdiv(M, g_m)), 8)     # padding waste < 8 rows per tile
    M_pad = g_m * tm

    # ---- lane-dense feature padding ----
    E_pad = _round_up(E, 128)
    H_base = _round_up(H, 128)

    # ---- H-chunk sized from a generation-aware VMEM budget ----
    budget = max(vmem_cap - (8 << 20), 16 << 20)      # headroom for Mosaic scratch
    fixed = (2 * tm * E_pad * c_item                  # x tile, double-buffered
             + 2 * tm * E_pad * 4                     # out tile, double-buffered
             + tm * E_pad * 4                         # fp32 accumulator scratch
             + 2 * E_pad * 4)                         # b2
    per_tk = 2 * (2 * E_pad * c_item + 4)             # W1^T col + W2^T row (x2 bufs) + b1
    tk = (max(budget - fixed, per_tk * 128) // per_tk) // 128 * 128
    tk = int(max(128, min(tk, H_base)))
    n_k = int(pl.cdiv(H_base, tk))
    H_pad = n_k * tk

    # Flatten rows, zero-pad everything (padded rows/cols are mathematically inert
    # and sliced off at the end).  Weights pre-transposed ONCE here.
    x2 = jnp.pad(x.reshape(M, E), ((0, M_pad - M), (0, E_pad - E))).astype(compute_dtype)
    w1t = jnp.pad(w1.T, ((0, E_pad - E), (0, H_pad - H))).astype(compute_dtype)  # (E_pad, H_pad)
    w2t = jnp.pad(w2.T, ((0, H_pad - H), (0, E_pad - E))).astype(compute_dtype)  # (H_pad, E_pad)
    b1p = jnp.pad(b1, (0, H_pad - H)).reshape(1, H_pad).astype(jnp.float32)
    b2p = jnp.pad(b2, (0, E_pad - E)).reshape(1, E_pad).astype(jnp.float32)

    # Cost estimate from the padded dims and the real bytes moved.
    weight_passes = 1 if n_k == 1 else g_m
    cost = pl.CostEstimate(
        flops=int(4 * M_pad * E_pad * H_pad),                 # two matmuls
        transcendentals=int(M_pad * H_pad),                   # erf on the intermediate
        bytes_accessed=int(c_item * (M_pad * E_pad + weight_passes * 2 * E_pad * H_pad)
                           + 4 * (M_pad * E_pad + H_pad + E_pad)),
    )

    out2 = pl.pallas_call(
        functools.partial(_mlp_kernel, compute_dtype=compute_dtype),
        out_shape=jax.ShapeDtypeStruct((M_pad, E_pad), out_dtype),
        grid_spec=pltpu.PrefetchScalarGridSpec(
            num_scalar_prefetch=0,
            grid=(g_m, n_k),
            in_specs=[
                pl.BlockSpec((tm, E_pad), lambda i, k: (i, 0)),   # x row tile
                pl.BlockSpec((E_pad, tk), lambda i, k: (0, k)),   # W1^T column chunk
                pl.BlockSpec((1, tk), lambda i, k: (0, k)),       # b1 chunk
                pl.BlockSpec((tk, E_pad), lambda i, k: (k, 0)),   # W2^T row chunk
                pl.BlockSpec((1, E_pad), lambda i, k: (0, 0)),    # b2 (resident)
            ],
            out_specs=pl.BlockSpec((tm, E_pad), lambda i, k: (i, 0)),
            scratch_shapes=[pltpu.VMEM((tm, E_pad), jnp.float32)],
        ),
        compiler_params=pltpu.CompilerParams(
            dimension_semantics=("parallel", "arbitrary"),
            vmem_limit_bytes=int(budget),
        ),
        cost_estimate=cost,
    )(x2, w1t, b1p, w2t, b2p)

    return out2[:M, :E].reshape(B, T, E)


def mlp_pallas(x, w1, b1, w2, b2, *, use_bf16=False, tile_m=None):
    """x: (B, T, E); w1: (H, E); b1: (H,); w2: (E, H); b2: (E,). Returns (B, T, E)."""
    return _mlp_pallas_impl(x, w1, b1, w2, b2, use_bf16=use_bf16, tile_m=tile_m,
                            vmem_cap=_vmem_capacity_bytes())


def mlp_reference(x, w1, b1, w2, b2):
    h = jnp.einsum("bte,he->bth", x, w1) + b1
    h = jax.nn.gelu(h, approximate=False)
    return jnp.einsum("bth,eh->bte", h, w2) + b2


def mlp(x, w1, b1, w2, b2, *, use_bf16=False, tile_m=None, min_pallas_dim=128):
    """Dispatcher: for feature dims far below one lane tile (E,H < 128), padded
    lane utilization is <3% and launch/DMA latency dominates, so plain XLA wins."""
    E = x.shape[-1]
    H = w1.shape[0]
    if max(E, H) < min_pallas_dim:
        return mlp_reference(x, w1, b1, w2, b2)
    return mlp_pallas(x, w1, b1, w2, b2, use_bf16=use_bf16, tile_m=tile_m)


if __name__ == "__main__":
    # config: n_embd=3, hidden = 4*n_embd = 12, dropout=0, bias=True
    n_embd = 3
    hidden = 4 * n_embd
    B, T = 2, 8  # block_size=40 is an upper bound; small seq for the test

    key = jax.random.PRNGKey(0)
    kx, k1, k2, k3, k4 = jax.random.split(key, 5)

    x = jax.random.normal(kx, (B, T, n_embd), dtype=jnp.float32)

    # deterministic parameter init (uniform, roughly matching nn.Linear fan-in scaling)
    bound1 = 1.0 / jnp.sqrt(n_embd)
    bound2 = 1.0 / jnp.sqrt(hidden)
    w1 = jax.random.uniform(k1, (hidden, n_embd), jnp.float32, -bound1, bound1)
    b1 = jax.random.uniform(k2, (hidden,), jnp.float32, -bound1, bound1)
    w2 = jax.random.uniform(k3, (n_embd, hidden), jnp.float32, -bound2, bound2)
    b2 = jax.random.uniform(k4, (n_embd,), jnp.float32, -bound2, bound2)

    ref = mlp_reference(x, w1, b1, w2, b2)

    # fp32 path: exact module semantics (erf GELU, fp32 matmuls).
    out = jax.block_until_ready(mlp_pallas(x, w1, b1, w2, b2))
    assert out.shape == (B, T, n_embd)
    assert jnp.allclose(out, ref, atol=1e-5, rtol=1e-5), "fp32 mismatch vs reference"

    # bf16 MXU path (perf option): fp32 accumulation, looser tolerance expected.
    out_bf16 = jax.block_until_ready(mlp_pallas(x, w1, b1, w2, b2, use_bf16=True))
    assert jnp.allclose(out_bf16, ref, atol=3e-2, rtol=3e-2), "bf16 mismatch vs reference"

    # TODO(synk): training-mode dropout (p>0) is not implemented; module uses p=0 (identity).
    print("KERNEL_OK")
</pallas_src>

<mosaic_0001>
module attributes {stable_mosaic.version = 11 : i64} {
  func.func @_mlp_kernel(%arg0: i32, %arg1: i32, %arg2: memref<8x128xf32, #tpu.memory_space<vmem>>, %arg3: memref<128x128xf32, #tpu.memory_space<vmem>>, %arg4: memref<1x128xf32, #tpu.memory_space<vmem>>, %arg5: memref<128x128xf32, #tpu.memory_space<vmem>>, %arg6: memref<1x128xf32, #tpu.memory_space<vmem>>, %arg7: memref<8x128xf32, #tpu.memory_space<vmem>>, %arg8: memref<8x128xf32, #tpu.memory_space<vmem>>) attributes {dimension_semantics = [#tpu.dimension_semantics<parallel>, #tpu.dimension_semantics<arbitrary>], iteration_bounds = array<i64: 2, 1>, scalar_prefetch = 0 : i64, scratch_operands = 1 : i64, tpu.core_type = #tpu.core_type<tc>, window_params = [{transform_indices = @transform_0, window_bounds = array<i64: 8, 128>}, {transform_indices = @transform_1, window_bounds = array<i64: 128, 128>}, {transform_indices = @transform_2, window_bounds = array<i64: 1, 128>}, {transform_indices = @transform_3, window_bounds = array<i64: 128, 128>}, {pipeline_mode = #tpu.pipeline_mode<synchronous>, transform_indices = @transform_4, window_bounds = array<i64: 1, 128>}, {transform_indices = @transform_5, window_bounds = array<i64: 8, 128>}]} {
    %c0_i32 = arith.constant 0 : i32
    %0 = arith.cmpi eq, %arg1, %c0_i32 : i32
    %1 = arith.extui %0 : i1 to i32
    %c0_i32_0 = arith.constant 0 : i32
    %2 = arith.cmpi ne, %1, %c0_i32_0 : i32
    scf.if %2 {
      %cst_18 = arith.constant 0.000000e+00 : f32
      %25 = vector.broadcast %cst_18 : f32 to vector<8x128xf32>
      %c0_19 = arith.constant 0 : index
      %c0_20 = arith.constant 0 : index
      %26 = vector.load %arg8[%c0_19, %c0_20] : memref<8x128xf32, #tpu.memory_space<vmem>>, vector<8x128xf32>
      tpu.vector_store %arg8[%c0_19, %c0_20], %25 {strides = array<i32>} : memref<8x128xf32, #tpu.memory_space<vmem>>, vector<8x128xf32>,
    } else {
    }
    %c0 = arith.constant 0 : index
    %c0_1 = arith.constant 0 : index
    %3 = vector.load %arg2[%c0, %c0_1] : memref<8x128xf32, #tpu.memory_space<vmem>>, vector<8x128xf32>
    %c0_2 = arith.constant 0 : index
    %c0_3 = arith.constant 0 : index
    %4 = vector.load %arg3[%c0_2, %c0_3] : memref<128x128xf32, #tpu.memory_space<vmem>>, vector<128x128xf32>
    %cst = arith.constant dense<0.000000e+00> : vector<8x128xf32>
    %5 = tpu.matmul %3, %4, %cst {dimension_numbers = #tpu.dot_dimension_numbers<[1], [0], [0], [1], [0, 0, 1, 1], [], []>} : vector<8x128xf32>, vector<128x128xf32>, vector<8x128xf32> -> vector<8x128xf32>
    %c0_4 = arith.constant 0 : index
    %c0_5 = arith.constant 0 : index
    %6 = vector.load %arg4[%c0_4, %c0_5] : memref<1x128xf32, #tpu.memory_space<vmem>>, vector<1x128xf32>
    %7 = vector.broadcast %6 : vector<1x128xf32> to vector<8x128xf32>
    %8 = arith.addf %5, %7 : vector<8x128xf32>
    %cst_6 = arith.constant 5.000000e-01 : f32
    %9 = vector.broadcast %cst_6 : f32 to vector<8x128xf32>
    %10 = arith.mulf %9, %8 : vector<8x128xf32>
    %cst_7 = arith.constant 0.707106769 : f32
    %11 = vector.broadcast %cst_7 : f32 to vector<8x128xf32>
    %12 = arith.mulf %8, %11 : vector<8x128xf32>
    %13 = math.erf %12 : vector<8x128xf32>
    %cst_8 = arith.constant 1.000000e+00 : f32
    %14 = vector.broadcast %cst_8 : f32 to vector<8x128xf32>
    %15 = arith.addf %14, %13 : vector<8x128xf32>
    %16 = arith.mulf %10, %15 : vector<8x128xf32>
    %c0_9 = arith.constant 0 : index
    %c0_10 = arith.constant 0 : index
    %17 = vector.load %arg8[%c0_9, %c0_10] : memref<8x128xf32, #tpu.memory_space<vmem>>, vector<8x128xf32>
    %c0_11 = arith.constant 0 : index
    %c0_12 = arith.constant 0 : index
    %18 = vector.load %arg5[%c0_11, %c0_12] : memref<128x128xf32, #tpu.memory_space<vmem>>, vector<128x128xf32>
    %cst_13 = arith.constant dense<0.000000e+00> : vector<8x128xf32>
    %19 = tpu.matmul %16, %18, %cst_13 {dimension_numbers = #tpu.dot_dimension_numbers<[1], [0], [0], [1], [0, 0, 1, 1], [], []>} : vector<8x128xf32>, vector<128x128xf32>, vector<8x128xf32> -> vector<8x128xf32>
    %20 = arith.addf %17, %19 : vector<8x128xf32>
    %c0_14 = arith.constant 0 : index
    %c0_15 = arith.constant 0 : index
    %21 = vector.load %arg8[%c0_14, %c0_15] : memref<8x128xf32, #tpu.memory_space<vmem>>, vector<8x128xf32>
    tpu.vector_store %arg8[%c0_14, %c0_15], %20 {strides = array<i32>} : memref<8x128xf32, #tpu.memory_space<vmem>>, vector<8x128xf32>,
    %c0_i32_16 = arith.constant 0 : i32
    %22 = arith.cmpi eq, %arg1, %c0_i32_16 : i32
    %23 = arith.extui %22 : i1 to i32
    %c0_i32_17 = arith.constant 0 : i32
    %24 = arith.cmpi ne, %23, %c0_i32_17 : i32
    scf.if %24 {
      %c0_18 = arith.constant 0 : index
      %c0_19 = arith.constant 0 : index
      %25 = vector.load %arg8[%c0_18, %c0_19] : memref<8x128xf32, #tpu.memory_space<vmem>>, vector<8x128xf32>
      %c0_20 = arith.constant 0 : index
      %c0_21 = arith.constant 0 : index
      %26 = vector.load %arg6[%c0_20, %c0_21] : memref<1x128xf32, #tpu.memory_space<vmem>>, vector<1x128xf32>
      %27 = vector.broadcast %26 : vector<1x128xf32> to vector<8x128xf32>
      %28 = arith.addf %25, %27 : vector<8x128xf32>
      %c0_22 = arith.constant 0 : index
      %c0_23 = arith.constant 0 : index
      %29 = vector.load %arg7[%c0_22, %c0_23] : memref<8x128xf32, #tpu.memory_space<vmem>>, vector<8x128xf32>
      tpu.vector_store %arg7[%c0_22, %c0_23], %28 {strides = array<i32>} : memref<8x128xf32, #tpu.memory_space<vmem>>, vector<8x128xf32>,
    } else {
    }
    return
  }
  func.func @transform_0(%arg0: i32, %arg1: i32) -> (i32, i32) {
    %c0_i32 = arith.constant 0 : i32
    %c0_i32_0 = arith.constant 0 : i32
    return %arg0, %c0_i32 : i32, i32
  }
  func.func @transform_1(%arg0: i32, %arg1: i32) -> (i32, i32) {
    %c0_i32 = arith.constant 0 : i32
    %c0_i32_0 = arith.constant 0 : i32
    return %c0_i32, %arg1 : i32, i32
  }
  func.func @transform_2(%arg0: i32, %arg1: i32) -> (i32, i32) {
    %c0_i32 = arith.constant 0 : i32
    %c0_i32_0 = arith.constant 0 : i32
    return %c0_i32, %arg1 : i32, i32
  }
  func.func @transform_3(%arg0: i32, %arg1: i32) -> (i32, i32) {
    %c0_i32 = arith.constant 0 : i32
    %c0_i32_0 = arith.constant 0 : i32
    return %arg1, %c0_i32 : i32, i32
  }
  func.func @transform_4(%arg0: i32, %arg1: i32) -> (i32, i32) {
    %c0_i32 = arith.constant 0 : i32
    %c0_i32_0 = arith.constant 0 : i32
    %c0_i32_1 = arith.constant 0 : i32
    return %c0_i32, %c0_i32_0 : i32, i32
  }
  func.func @transform_5(%arg0: i32, %arg1: i32) -> (i32, i32) {
    %c0_i32 = arith.constant 0 : i32
    %c0_i32_0 = arith.constant 0 : i32
    return %arg0, %c0_i32 : i32, i32
  }
}

</mosaic_0001>

<llo_original>
// kernel: _mlp_pallas_impl.1
$region0: #{_mlp_pallas_impl.1}
  #allocation0 [shape = 'u32[]', space=smem, size = 0x4, offset = 0x4, fixed_abs, tag = 'smem constant byte address 0x4 - core index']
  #allocation1 [shape = 'u32[144,128]{1,0:T(1,128)}', space=vmem, size = 0x12000, scoped, tag = 'internal scratch']
  #allocation2 [shape = 'f32[8,128]{1,0:T(8,128)}', space=vmem, size = 0x1000, scoped, tag = 'scratch operand']
  %s0 = inlined_call_operand.vmem [shape: f32[16,128], index: 0, kind: input, shape index: {}]
  %s1 = inlined_call_operand.vmem [shape: f32[128,128], index: 1, kind: input, shape index: {}]
  %s2 = inlined_call_operand.vmem [shape: f32[1,128], index: 2, kind: input, shape index: {}]
  %s3 = inlined_call_operand.vmem [shape: f32[128,128], index: 3, kind: input, shape index: {}]
  %s4 = inlined_call_operand.vmem [shape: f32[1,128], index: 4, kind: input, shape index: {}]
  %s5 = inlined_call_operand.vmem [shape: f32[16,128], index: 5, kind: output, shape index: {}]
  %s6 = sld [smem:[#allocation0]]
  $region61: #{_mlp_pallas_impl.1} parent=0
    _
  %s8 = ssub.s32 1, %s6
  %s9 = scalar_select 0, %s8, %s6
  loop: start=0, step=1, limit=4
  $region2: #{_mlp_pallas_impl.1} parent=0 // loop_pre_header
    _
  $region3: #{_mlp_pallas_impl.1} parent=0 // loop_header
    %s11 = sphi 0, %s15
    %p12 = scmp.ge.s32.totalorder %s11, 4
    %s18 = sphi 0, %s30
    %s19 = sphi 0, %s26
    %s20 = sphi 0, %s18
    %s21 = sphi 0, %s19
    %s22 = sphi 0, %s20
    %s23 = sphi 0, %s21
    %s33 = sphi 0, %s35
    %s36 = sphi 0, %s33
    %s37 = sphi 0, %s36
    %s53 = sphi 0, %s37
    %s59 = sphi 0, %s61
    %s62 = sphi 0, %s59
    %s63 = sphi 0, %s62
    %s79 = sphi 0, %s63
    %s85 = sphi 0, %s87
    %s88 = sphi 0, %s85
    %s89 = sphi 0, %s88
    %s105 = sphi 0, %s89
    %s111 = sphi 0, %s113
    %s114 = sphi 0, %s111
    %s115 = sphi 0, %s114
    %s131 = sphi 0, %s115
    %s135 = sphi 0, %s135
    %s137 = sphi 0, %s135
    %s138 = sphi 0, %s137
    %s152 = sphi 0, %s138
    %s158 = sphi 0, %s160
    %s161 = sphi 0, %s158
    %s162 = sphi 0, %s161
    %s178 = sphi 0, %s162
  $region4: #{_mlp_pallas_impl.1} parent=0 // loop_header_branch
    %14 = sbr.rel (%p12) target = $region8
  $region5: #{_mlp_pallas_impl.1} parent=0 // loop_body
    %s16 = ssub.s32 %s11, 1
    %s17 = ssub.s32 %s11, 2
    %s24 = sadd.s32 1, %s19
    %p25 = scmp.ge.s32.totalorder %s24, 1
    %s26 = scalar_select %p25, 0, %s24
    %s27 = sadd.s32 1, %s18
    %s28 = scalar_select %p25, %s27, %s18
    %p29 = scmp.ge.s32.totalorder %s28, 2
    %s30 = scalar_select %p29, 0, %s28
    %s31 = ssub.s32 %s18, %s30
    %p32 = scmp.eq.s32.totalorder %s31, 0
    %s34 = sadd.s32 %s33, 1
    %s35 = scalar_select %p32, %s33, %s34
    %p38 = pneg %p32
    %p39 = scmp.eq.s32.totalorder %s11, 1
    %p40 = por %p38, %p39
    %p41 = scmp.ne.s32.totalorder %s33, %s36
    %p42 = scmp.eq.s32.totalorder %s11, 0
    %p43 = por %p41, %p42
    %p44 = scmp.ne.s32.totalorder %s33, %s36
    %p45 = scmp.eq.s32.totalorder %s16, 1
    %p46 = por %p44, %p45
    %p47 = scmp.ne.s32.totalorder %s36, %s37
    %p48 = scmp.eq.s32.totalorder %s16, 0
    %p49 = por %p47, %p48
    %p50 = scmp.ne.s32.totalorder %s36, %s37
    %p51 = scmp.eq.s32.totalorder %s17, 1
    %p52 = por %p50, %p51
    %p54 = scmp.ne.s32.totalorder %s37, %s53
    %p55 = scmp.eq.s32.totalorder %s17, 0
    %p56 = por %p54, %p55
    %s57 = ssub.s32 %s19, %s26
    %p58 = scmp.eq.s32.totalorder %s57, 0
    %s60 = sadd.s32 %s59, 1
    %s61 = scalar_select %p58, %s59, %s60
    %p64 = pneg %p58
    %p65 = scmp.eq.s32.totalorder %s11, 1
    %p66 = por %p64, %p65
    %p67 = scmp.ne.s32.totalorder %s59, %s62
    %p68 = scmp.eq.s32.totalorder %s11, 0
    %p69 = por %p67, %p68
    %p70 = scmp.ne.s32.totalorder %s59, %s62
    %p71 = scmp.eq.s32.totalorder %s16, 1
    %p72 = por %p70, %p71
    %p73 = scmp.ne.s32.totalorder %s62, %s63
    %p74 = scmp.eq.s32.totalorder %s16, 0
    %p75 = por %p73, %p74
    %p76 = scmp.ne.s32.totalorder %s62, %s63
    %p77 = scmp.eq.s32.totalorder %s17, 1
    %p78 = por %p76, %p77
    %p80 = scmp.ne.s32.totalorder %s63, %s79
    %p81 = scmp.eq.s32.totalorder %s17, 0
    %p82 = por %p80, %p81
    %s83 = ssub.s32 %s19, %s26
    %p84 = scmp.eq.s32.totalorder %s83, 0
    %s86 = sadd.s32 %s85, 1
    %s87 = scalar_select %p84, %s85, %s86
    %p90 = pneg %p84
    %p91 = scmp.eq.s32.totalorder %s11, 1
    %p92 = por %p90, %p91
    %p93 = scmp.ne.s32.totalorder %s85, %s88
    %p94 = scmp.eq.s32.totalorder %s11, 0
    %p95 = por %p93, %p94
    %p96 = scmp.ne.s32.totalorder %s85, %s88
    %p97 = scmp.eq.s32.totalorder %s16, 1
    %p98 = por %p96, %p97
    %p99 = scmp.ne.s32.totalorder %s88, %s89
    %p100 = scmp.eq.s32.totalorder %s16, 0
    %p101 = por %p99, %p100
    %p102 = scmp.ne.s32.totalorder %s88, %s89
    %p103 = scmp.eq.s32.totalorder %s17, 1
    %p104 = por %p102, %p103
    %p106 = scmp.ne.s32.totalorder %s89, %s105
    %p107 = scmp.eq.s32.totalorder %s17, 0
    %p108 = por %p106, %p107
    %s109 = ssub.s32 %s19, %s26
    %p110 = scmp.eq.s32.totalorder %s109, 0
    %s112 = sadd.s32 %s111, 1
    %s113 = scalar_select %p110, %s111, %s112
    %p116 = pneg %p110
    %p117 = scmp.eq.s32.totalorder %s11, 1
    %p118 = por %p116, %p117
    %p119 = scmp.ne.s32.totalorder %s111, %s114
    %p120 = scmp.eq.s32.totalorder %s11, 0
    %p121 = por %p119, %p120
    %p122 = scmp.ne.s32.totalorder %s111, %s114
    %p123 = scmp.eq.s32.totalorder %s16, 1
    %p124 = por %p122, %p123
    %p125 = scmp.ne.s32.totalorder %s114, %s115
    %p126 = scmp.eq.s32.totalorder %s16, 0
    %p127 = por %p125, %p126
    %p128 = scmp.ne.s32.totalorder %s114, %s115
    %p129 = scmp.eq.s32.totalorder %s17, 1
    %p130 = por %p128, %p129
    %p132 = scmp.ne.s32.totalorder %s115, %s131
    %p133 = scmp.eq.s32.totalorder %s17, 0
    %p134 = por %p132, %p133
    %s136 = sadd.s32 %s135, 1
    %p139 = scmp.eq.s32.totalorder %s11, 1
    %p140 = scmp.ne.s32.totalorder %s135, %s137
    %p141 = scmp.eq.s32.totalorder %s11, 0
    %p142 = por %p140, %p141
    %p143 = scmp.ne.s32.totalorder %s135, %s137
    %p144 = scmp.eq.s32.totalorder %s16, 1
    %p145 = por %p143, %p144
    %p146 = scmp.ne.s32.totalorder %s137, %s138
    %p147 = scmp.eq.s32.totalorder %s16, 0
    %p148 = por %p146, %p147
    %p149 = scmp.ne.s32.totalorder %s137, %s138
    %p150 = scmp.eq.s32.totalorder %s17, 1
    %p151 = por %p149, %p150
    %p153 = scmp.ne.s32.totalorder %s138, %s152
    %p154 = scmp.eq.s32.totalorder %s17, 0
    %p155 = por %p153, %p154
    %s156 = ssub.s32 %s18, %s30
    %p157 = scmp.eq.s32.totalorder %s156, 0
    %s159 = sadd.s32 %s158, 1
    %s160 = scalar_select %p157, %s158, %s159
    %p163 = pneg %p157
    %p164 = scmp.eq.s32.totalorder %s11, 1
    %p165 = por %p163, %p164
    %p166 = scmp.ne.s32.totalorder %s158, %s161
    %p167 = scmp.eq.s32.totalorder %s11, 0
    %p168 = por %p166, %p167
    %p169 = scmp.ne.s32.totalorder %s158, %s161
    %p170 = scmp.eq.s32.totalorder %s16, 1
    %p171 = por %p169, %p170
    %p172 = scmp.ne.s32.totalorder %s161, %s162
    %p173 = scmp.eq.s32.totalorder %s16, 0
    %p174 = por %p172, %p173
    %p175 = scmp.ne.s32.totalorder %s161, %s162
    %p176 = scmp.eq.s32.totalorder %s17, 1
    %p177 = por %p175, %p176
    %p179 = scmp.ne.s32.totalorder %s162, %s178
    %p180 = scmp.eq.s32.totalorder %s17, 0
    %p181 = por %p179, %p180
    %p182 = scmp.le.s32.totalorder 1, %s11
    %p183 = scmp.lt.s32.totalorder %s11, 3
    %p184 = pnand %p182, %p183
    %p185 = pneg %p184
    // Predicated region
    $region9: #{_mlp_pallas_impl.1} parent=5 // pred_check
      _
    $region10: #{_mlp_pallas_impl.1} parent=5 // pred_check_branch
      %187 = sbr.rel (%p184) target = $region12
    $region11: #{_mlp_pallas_impl.1} parent=5 // pred_region
      %s188 = ssub.s32 %s11, 1
      // Predicated region
      $region13: #{_mlp_pallas_impl.1} parent=11 // pred_check
        %p189 = pneg %p75
      $region14: #{_mlp_pallas_impl.1} parent=11 // pred_check_branch
        %191 = sbr.rel (%p189) target = $region16
      $region15: #{_mlp_pallas_impl.1} parent=11 // pred_region
        %p192 = scmp.lt.s32.totalorder %s21, 0
        %s193 = scalar_select %p192, %s21, 0
        %s194 = smul.addr %s193, 8
        %s195 = scalar_lea.vmem %s1, %s194
      $region16: #{_mlp_pallas_impl.1} parent=11 // pred_fallthru
        _
      // Predicated region
      $region17: #{_mlp_pallas_impl.1} parent=11 // pred_check
        %p196 = pneg %p101
      $region18: #{_mlp_pallas_impl.1} parent=11 // pred_check_branch
        %198 = sbr.rel (%p196) target = $region20
      $region19: #{_mlp_pallas_impl.1} parent=11 // pred_region
        %p199 = scmp.lt.s32.totalorder %s21, 0
        %s200 = scalar_select %p199, %s21, 0
        %s201 = scalar_lea.vmem %s2, %s200
      $region20: #{_mlp_pallas_impl.1} parent=11 // pred_fallthru
        _
      // Predicated region
      $region21: #{_mlp_pallas_impl.1} parent=11 // pred_check
        %p202 = pneg %p127
      $region22: #{_mlp_pallas_impl.1} parent=11 // pred_check_branch
        %204 = sbr.rel (%p202) target = $region24
      $region23: #{_mlp_pallas_impl.1} parent=11 // pred_region
        %s205 = smul.u32 16, %s21
        %p206 = scmp.lt.s32.totalorder %s205, 15
        %s207 = scalar_select %p206, %s205, 15
        %s208 = smul.addr %s207, 8
        %s209 = scalar_lea.vmem %s3, %s208
        %s210 = smul.u32 16, %s21
      $region24: #{_mlp_pallas_impl.1} parent=11 // pred_fallthru
        _
      // Predicated region
      $region25: #{_mlp_pallas_impl.1} parent=11 // pred_check
        %p211 = pneg %p148
      $region26: #{_mlp_pallas_impl.1} parent=11 // pred_check_branch
        %213 = sbr.rel (%p211) target = $region28
      $region27: #{_mlp_pallas_impl.1} parent=11 // pred_region
        _
      $region28: #{_mlp_pallas_impl.1} parent=11 // pred_fallthru
        _
    $region12: #{_mlp_pallas_impl.1} parent=5 // pred_fallthru
      _
    %p214 = scmp.lt.s32.totalorder %s11, 2
    // Predicated region
    $region29: #{_mlp_pallas_impl.1} parent=5 // pred_check
      %p215 = pneg %p214
    $region30: #{_mlp_pallas_impl.1} parent=5 // pred_check_branch
      %217 = sbr.rel (%p215) target = $region32
    $region31: #{_mlp_pallas_impl.1} parent=5 // pred_region
      // Predicated region
      $region33: #{_mlp_pallas_impl.1} parent=31 // pred_check
        %p218 = pneg %p43
      $region34: #{_mlp_pallas_impl.1} parent=31 // pred_check_branch
        %220 = sbr.rel (%p218) target = $region36
      $region35: #{_mlp_pallas_impl.1} parent=31 // pred_region
        %p221 = scmp.lt.s32.totalorder %s18, 1
        %s222 = scalar_select %p221, %s18, 1
        %s223 = smul.addr %s222, 8
        %s224 = scalar_lea.vmem %s0, %s223
      $region36: #{_mlp_pallas_impl.1} parent=31 // pred_fallthru
        _
    $region32: #{_mlp_pallas_impl.1} parent=5 // pred_fallthru
      _
    %p225 = scmp.le.s32.totalorder 1, %s11
    %p226 = scmp.lt.s32.totalorder %s11, 3
    %p227 = pnand %p225, %p226
    %p228 = pneg %p227
    // Predicated region
    $region37: #{_mlp_pallas_impl.1} parent=5 // pred_check
      _
    $region38: #{_mlp_pallas_impl.1} parent=5 // pred_check_branch
      %230 = sbr.rel (%p227) target = $region40
    $region39: #{_mlp_pallas_impl.1} parent=5 // pred_region
      %s231 = ssub.s32 %s11, 1
      %p232 = scmp.lt.s32.totalorder %s20, 1
      %s233 = scalar_select %p232, %s20, 1
      %s234 = smul.addr %s233, 8
      %s235 = scalar_lea.vmem %s0, %s234
      %p236 = pneg %p49
      %p237 = pneg %p46
      %p238 = scmp.lt.s32.totalorder %s21, 0
      %s239 = scalar_select %p238, %s21, 0
      %s240 = smul.addr %s239, 8
      %s241 = scalar_lea.vmem %s1, %s240
      %p242 = pneg %p75
      %p243 = pneg %p72
      %p244 = scmp.lt.s32.totalorder %s21, 0
      %s245 = scalar_select %p244, %s21, 0
      %s246 = scalar_lea.vmem %s2, %s245
      %p247 = pneg %p101
      %p248 = pneg %p98
      %s249 = smul.u32 16, %s21
      %p250 = scmp.lt.s32.totalorder %s249, 15
      %s251 = scalar_select %p250, %s249, 15
      %s252 = smul.addr %s251, 8
      %s253 = scalar_lea.vmem %s3, %s252
      %p254 = pneg %p127
      %p255 = pneg %p124
      %p256 = pneg %p148
      %p257 = pneg %p145
      %p258 = pneg %p174
      %p259 = pneg %p171
      %p260 = scmp.lt.s32.totalorder %s20, 1
      %s261 = scalar_select %p260, %s20, 1
      %s262 = smul.addr %s261, 8
      %s263 = scalar_lea.vmem %s5, %s262
      %p264 = scmp.lt.s32.totalorder %s20, 1
      %s265 = scalar_select %p264, %s20, 1
      %s266 = smul.addr %s265, 8
      %s267 = scalar_lea.vmem %s0, %s266
      %p268 = scmp.lt.s32.totalorder %s21, 0
      %s269 = scalar_select %p268, %s21, 0
      %s270 = smul.addr %s269, 8
      %s271 = scalar_lea.vmem %s1, %s270
      %p272 = scmp.lt.s32.totalorder %s21, 0
      %s273 = scalar_select %p272, %s21, 0
      %s274 = scalar_lea.vmem %s2, %s273
      %s275 = smul.u32 16, %s21
      %p276 = scmp.lt.s32.totalorder %s275, 15
      %s277 = scalar_select %p276, %s275, 15
      %s278 = smul.addr %s277, 8
      %s279 = scalar_lea.vmem %s3, %s278
      %s280 = smul.u32 16, %s21
      %p281 = scmp.lt.s32.totalorder %s20, 1
      %s282 = scalar_select %p281, %s20, 1
      %s283 = smul.addr %s282, 8
      %s284 = scalar_lea.vmem %s5, %s283
      %p285 = scmp.eq.s32.totalorder %s21, 0
      // Predicated region
      $region41: #{_mlp_pallas_impl.1} parent=39 // pred_check
        %p286 = pneg %p285
      $region42: #{_mlp_pallas_impl.1} parent=39 // pred_check_branch
        %288 = sbr.rel (%p286) target = $region44
      $region43: #{_mlp_pallas_impl.1} parent=39 // pred_region
        %289 = vst [vmem:[#allocation2] sm:$0xff] 0.0
      $region44: #{_mlp_pallas_impl.1} parent=39 // pred_fallthru
        _
      %v290 = vld [vmem:[%s267] sm:$0xff]
      %v291 = vld [vmem:[%s271] sm:$0xff]
      %v292 = vld [vmem:[%s271 + $0x8] sm:$0xff]
      %v293 = vld [vmem:[%s271 + $0x10] sm:$0xff]
      %v294 = vld [vmem:[%s271 + $0x18] sm:$0xff]
      %v295 = vld [vmem:[%s271 + $0x20] sm:$0xff]
      %v296 = vld [vmem:[%s271 + $0x28] sm:$0xff]
      %v297 = vld [vmem:[%s271 + $0x30] sm:$0xff]
      %v298 = vld [vmem:[%s271 + $0x38] sm:$0xff]
      %v299 = vld [vmem:[%s271 + $0x40] sm:$0xff]
      %v300 = vld [vmem:[%s271 + $0x48] sm:$0xff]
      %v301 = vld [vmem:[%s271 + $0x50] sm:$0xff]
      %v302 = vld [vmem:[%s271 + $0x58] sm:$0xff]
      %v303 = vld [vmem:[%s271 + $0x60] sm:$0xff]
      %v304 = vld [vmem:[%s271 + $0x68] sm:$0xff]
      %v305 = vld [vmem:[%s271 + $0x70] sm:$0xff]
      %v306 = vld [vmem:[%s271 + $0x78] sm:$0xff]
      %v307 = vld [vmem:[%s274] sm:$0x1]
      %v309 = vlaneseq
      %v310 = vshrl.u32 %v309, 7
      %v311 = vsub.s32 0, %v310
      %v312 = vrot.slane %v307, %v311
      %314 = vmatprep.subr.mxu0 0.0
      %315 = vmatpush1.msra.mxu0 %v291
      %316 = vmatprep.subr.mxu0 0.0
      %317 = vmatpush1.msra.mxu0 %v292
      %318 = vmatprep.subr.mxu0 0.0
      %319 = vmatpush1.msra.mxu0 %v293
      %320 = vmatprep.subr.mxu0 0.0
      %321 = vmatpush1.msra.mxu0 %v294
      %322 = vmatprep.subr.mxu0 0.0
      %323 = vmatpush1.msra.mxu0 %v295
      %324 = vmatprep.subr.mxu0 0.0
      %325 = vmatpush1.msra.mxu0 %v296
      %326 = vmatprep.subr.mxu0 0.0
      %327 = vmatpush1.msra.mxu0 %v297
      %328 = vmatprep.subr.mxu0 0.0
      %329 = vmatpush1.msra.mxu0 %v298
      %330 = vmatprep.subr.mxu0 0.0
      %331 = vmatpush1.msra.mxu0 %v299
      %332 = vmatprep.subr.mxu0 0.0
      %333 = vmatpush1.msra.mxu0 %v300
      %334 = vmatprep.subr.mxu0 0.0
      %335 = vmatpush1.msra.mxu0 %v301
      %336 = vmatprep.subr.mxu0 0.0
      %337 = vmatpush1.msra.mxu0 %v302
      %338 = vmatprep.subr.mxu0 0.0
      %339 = vmatpush1.msra.mxu0 %v303
      %340 = vmatprep.subr.mxu0 0.0
      %341 = vmatpush1.msra.mxu0 %v304
      %342 = vmatprep.subr.mxu0 0.0
      %343 = vmatpush1.msra.mxu0 %v305
      %344 = vmatprep.subr.mxu0 0.0
      %345 = vmatpush1.msra.mxu0 %v306
      %346 = vmatprep.subr.mxu0 0.0
      %347 = vmatpush1.msra.mxu0 0.0
      %348 = vmatprep.subr.mxu0 0.0
      %349 = vmatpush1.msra.mxu0 0.0
      %350 = vmatprep.subr.mxu0 0.0
      %351 = vmatpush1.msra.mxu0 0.0
      %352 = vmatprep.subr.mxu0 0.0
      %353 = vmatpush1.msra.mxu0 0.0
      %354 = vmatprep.subr.mxu0 0.0
      %355 = vmatpush1.msra.mxu0 0.0
      %356 = vmatprep.subr.mxu0 0.0
      %357 = vmatpush1.msra.mxu0 0.0
      %358 = vmatprep.subr.mxu0 0.0
      %359 = vmatpush1.msra.mxu0 0.0
      %360 = vmatprep.subr.mxu0 0.0
      %361 = vmatpush1.msra.mxu0 0.0
      %362 = vmatprep.subr.mxu0 0.0
      %363 = vmatpush1.msra.mxu0 0.0
      %364 = vmatprep.subr.mxu0 0.0
      %365 = vmatpush1.msra.mxu0 0.0
      %366 = vmatprep.subr.mxu0 0.0
      %367 = vmatpush1.msra.mxu0 0.0
      %368 = vmatprep.subr.mxu0 0.0
      %369 = vmatpush1.msra.mxu0 0.0
      %370 = vmatprep.subr.mxu0 0.0
      %371 = vmatpush1.msra.mxu0 0.0
      %372 = vmatprep.subr.mxu0 0.0
      %373 = vmatpush1.msra.mxu0 0.0
      %374 = vmatprep.subr.mxu0 0.0
      %375 = vmatpush1.msra.mxu0 0.0
      %376 = vmatprep.subr.mxu0 0.0
      %377 = vmatpush1.msra.mxu0 0.0
      %378 = vmatprep.mubr.f32.mxu0 0.0
      %379 = vmatmul.mubr.f32.gmra.mrb[0].mxu0 %v290
      %v380 = vpop.f32.mrb[0].mxu0
      %v381 = vadd.f32 %v312, %v380
      %v382 = vpop.f32.mrb[0].mxu0
      %383 = vdwg.mxu0
      %v384 = vmul.f32 %v381, 0.5
      %v385 = vmul.f32 %v381, 0.70710677
      %v386 = verf.f32.pop %v385
      %v387 = vadd.f32 %v386, 1.0
      %v388 = vmul.f32 %v384, %v387
      %v389 = vld [vmem:[#allocation2] sm:$0xff]
      %v390 = vld [vmem:[%s279] sm:$0xff]
      %v391 = vld [vmem:[%s279 + $0x8] sm:$0xff]
      %v392 = vld [vmem:[%s279 + $0x10] sm:$0xff]
      %v393 = vld [vmem:[%s279 + $0x18] sm:$0xff]
      %v394 = vld [vmem:[%s279 + $0x20] sm:$0xff]
      %v395 = vld [vmem:[%s279 + $0x28] sm:$0xff]
      %v396 = vld [vmem:[%s279 + $0x30] sm:$0xff]
      %v397 = vld [vmem:[%s279 + $0x38] sm:$0xff]
      %v398 = vld [vmem:[%s279 + $0x40] sm:$0xff]
      %v399 = vld [vmem:[%s279 + $0x48] sm:$0xff]
      %v400 = vld [vmem:[%s279 + $0x50] sm:$0xff]
      %v401 = vld [vmem:[%s279 + $0x58] sm:$0xff]
      %v402 = vld [vmem:[%s279 + $0x60] sm:$0xff]
      %v403 = vld [vmem:[%s279 + $0x68] sm:$0xff]
      %v404 = vld [vmem:[%s279 + $0x70] sm:$0xff]
      %v405 = vld [vmem:[%s279 + $0x78] sm:$0xff]
      %406 = vmatprep.subr.mxu0 0.0
      %407 = vmatpush1.msra.mxu0 %v390
      %408 = vmatprep.subr.mxu0 0.0
      %409 = vmatpush1.msra.mxu0 %v391
      %410 = vmatprep.subr.mxu0 0.0
      %411 = vmatpush1.msra.mxu0 %v392
      %412 = vmatprep.subr.mxu0 0.0
      %413 = vmatpush1.msra.mxu0 %v393
      %414 = vmatprep.subr.mxu0 0.0
      %415 = vmatpush1.msra.mxu0 %v394
      %416 = vmatprep.subr.mxu0 0.0
      %417 = vmatpush1.msra.mxu0 %v395
      %418 = vmatprep.subr.mxu0 0.0
      %419 = vmatpush1.msra.mxu0 %v396
      %420 = vmatprep.subr.mxu0 0.0
      %421 = vmatpush1.msra.mxu0 %v397
      %422 = vmatprep.subr.mxu0 0.0
      %423 = vmatpush1.msra.mxu0 %v398
      %424 = vmatprep.subr.mxu0 0.0
      %425 = vmatpush1.msra.mxu0 %v399
      %426 = vmatprep.subr.mxu0 0.0
      %427 = vmatpush1.msra.mxu0 %v400
      %428 = vmatprep.subr.mxu0 0.0
      %429 = vmatpush1.msra.mxu0 %v401
      %430 = vmatprep.subr.mxu0 0.0
      %431 = vmatpush1.msra.mxu0 %v402
      %432 = vmatprep.subr.mxu0 0.0
      %433 = vmatpush1.msra.mxu0 %v403
      %434 = vmatprep.subr.mxu0 0.0
      %435 = vmatpush1.msra.mxu0 %v404
      %436 = vmatprep.subr.mxu0 0.0
      %437 = vmatpush1.msra.mxu0 %v405
      %438 = vmatprep.subr.mxu0 0.0
      %439 = vmatpush1.msra.mxu0 0.0
      %440 = vmatprep.subr.mxu0 0.0
      %441 = vmatpush1.msra.mxu0 0.0
      %442 = vmatprep.subr.mxu0 0.0
      %443 = vmatpush1.msra.mxu0 0.0
      %444 = vmatprep.subr.mxu0 0.0
      %445 = vmatpush1.msra.mxu0 0.0
      %446 = vmatprep.subr.mxu0 0.0
      %447 = vmatpush1.msra.mxu0 0.0
      %448 = vmatprep.subr.mxu0 0.0
      %449 = vmatpush1.msra.mxu0 0.0
      %450 = vmatprep.subr.mxu0 0.0
      %451 = vmatpush1.msra.mxu0 0.0
      %452 = vmatprep.subr.mxu0 0.0
      %453 = vmatpush1.msra.mxu0 0.0
      %454 = vmatprep.subr.mxu0 0.0
      %455 = vmatpush1.msra.mxu0 0.0
      %456 = vmatprep.subr.mxu0 0.0
      %457 = vmatpush1.msra.mxu0 0.0
      %458 = vmatprep.subr.mxu0 0.0
      %459 = vmatpush1.msra.mxu0 0.0
      %460 = vmatprep.subr.mxu0 0.0
      %461 = vmatpush1.msra.mxu0 0.0
      %462 = vmatprep.subr.mxu0 0.0
      %463 = vmatpush1.msra.mxu0 0.0
      %464 = vmatprep.subr.mxu0 0.0
      %465 = vmatpush1.msra.mxu0 0.0
      %466 = vmatprep.subr.mxu0 0.0
      %467 = vmatpush1.msra.mxu0 0.0
      %468 = vmatprep.subr.mxu0 0.0
      %469 = vmatpush1.msra.mxu0 0.0
      %470 = vmatprep.mubr.f32.mxu0 0.0
      %471 = vmatmul.mubr.f32.gmra.mrb[0].mxu0 %v388
      %v472 = vpop.f32.mrb[0].mxu0
      %v473 = vadd.f32 0.0, %v472
      %v474 = vpop.f32.mrb[0].mxu0
      %475 = vdwg.mxu0
      %v476 = vadd.f32 %v389, %v473
      %477 = vst [vmem:[#allocation2] sm:$0xff] %v476
      // Predicated region
      $region45: #{_mlp_pallas_impl.1} parent=39 // pred_check
        %p478 = pneg %p285
      $region46: #{_mlp_pallas_impl.1} parent=39 // pred_check_branch
        %480 = sbr.rel (%p478) target = $region48
      $region47: #{_mlp_pallas_impl.1} parent=39 // pred_region
        %v481 = vld [vmem:[#allocation2] sm:$0xff]
        %v482 = vld [vmem:[%s4] sm:$0x1]
        %v484 = vlaneseq
        %v485 = vshrl.u32 %v484, 7
        %v486 = vsub.s32 0, %v485
        %v487 = vrot.slane %v482, %v486
        %v489 = vadd.f32 %v481, %v487
        %490 = vst [vmem:[%s284] sm:$0xff] %v489
      $region48: #{_mlp_pallas_impl.1} parent=39 // pred_fallthru
        _
      %p491 = scmp.lt.s32.totalorder %s20, 1
      %s492 = scalar_select %p491, %s20, 1
      %s493 = smul.addr %s492, 8
      %s494 = scalar_lea.vmem %s5, %s493
      // Predicated region
      $region49: #{_mlp_pallas_impl.1} parent=39 // pred_check
        %p495 = pneg %p171
      $region50: #{_mlp_pallas_impl.1} parent=39 // pred_check_branch
        %497 = sbr.rel (%p495) target = $region52
      $region51: #{_mlp_pallas_impl.1} parent=39 // pred_region
        _
      $region52: #{_mlp_pallas_impl.1} parent=39 // pred_fallthru
        _
    $region40: #{_mlp_pallas_impl.1} parent=5 // pred_fallthru
      _
    %p498 = scmp.le.s32.totalorder 2, %s11
    // Predicated region
    $region53: #{_mlp_pallas_impl.1} parent=5 // pred_check
      %p499 = pneg %p498
    $region54: #{_mlp_pallas_impl.1} parent=5 // pred_check_branch
      %501 = sbr.rel (%p499) target = $region56
    $region55: #{_mlp_pallas_impl.1} parent=5 // pred_region
      %s502 = ssub.s32 %s11, 2
      // Predicated region
      $region57: #{_mlp_pallas_impl.1} parent=55 // pred_check
        %p503 = pneg %p177
      $region58: #{_mlp_pallas_impl.1} parent=55 // pred_check_branch
        %505 = sbr.rel (%p503) target = $region60
      $region59: #{_mlp_pallas_impl.1} parent=55 // pred_region
        %p506 = scmp.lt.s32.totalorder %s22, 1
        %s507 = scalar_select %p506, %s22, 1
        %s508 = smul.addr %s507, 8
        %s509 = scalar_lea.vmem %s5, %s508
      $region60: #{_mlp_pallas_impl.1} parent=55 // pred_fallthru
        _
    $region56: #{_mlp_pallas_impl.1} parent=5 // pred_fallthru
      _
  $region6: #{_mlp_pallas_impl.1} parent=0 // loop_footer
    %s15 = sadd.s32 1, %s11
  $region7: #{_mlp_pallas_impl.1} parent=0 // loop_footer_branch
    %10 = sbr.rel target = $region3
  $region8: #{_mlp_pallas_impl.1} parent=0 // loop_exit
    _

</llo_original>
